<compile_context>
chip_gen: v7x
topology: tpu7x:2x2x1
jax: 0.10.0
libtpu: 0.0.40
codegen_flags: <defaults>
</compile_context>

<pallas_src>
import jax
import jax.numpy as jnp
from jax import lax
from jax.experimental import pallas as pl
from jax.experimental.pallas import tpu as pltpu

# ---- small, deterministic "config" ----
N_VOCAB      = 50
EMBED        = 32
NUM_FILTERS  = 8
FILTER_SIZES = (2, 3, 4)
NUM_CLASSES  = 5
BATCH        = 2
SEQ          = 16

KMAX  = max(FILTER_SIZES)                       # 4 -> unfold width KMAX*EMBED = 128 lanes
V_PAD = 1 << (N_VOCAB - 1).bit_length()         # 64: pow2 (lane-mod trick) + bf16 packing
C_PAD = 128                                     # class dim padded to a full 128-lane vreg


def textcnn_kernel(tokrep_ref, tblk_ref, wcat_ref, bconv_ref, mask_ref,
                   wfc_ref, bfc_ref, out_ref):
    BS, W = tokrep_ref.shape                    # (B*S, KMAX*V_PAD)
    B, Cp = out_ref.shape
    S, FT = mask_ref.shape                      # (SEQ, 3*F)

    # One-hot over the unfolded-token lanes: lane c selects vocab id (c % V_PAD)
    # inside its dt block.  Pure VPU: 2-D iota + AND + compare, built as bf16.
    vidx = lax.broadcasted_iota(jnp.int32, (BS, W), 1) & (V_PAD - 1)
    onehot = (vidx == tokrep_ref[...]).astype(jnp.bfloat16)           # (B*S, 4*Vpad)

    # Fused embedding lookup + im2col unfold: one bf16 MXU matmul against the
    # block-diagonal table yields the lane-dense unfold directly -- no rolls,
    # no lane-concats, no unaligned sublane slices.
    unf = jnp.dot(onehot, tblk_ref[...],
                  preferred_element_type=jnp.float32)                 # (B*S, 4*E) f32
    unf = unf.astype(jnp.bfloat16)                                    # exact (one-hot select)

    # All three conv branches in a single matmul, full 128-deep contraction.
    conv = jnp.dot(unf, wcat_ref[...],
                   preferred_element_type=jnp.float32)                # (B*S, 3*F) f32

    # Mask invalid window starts (t > S-k, per branch filter group) with -1e30
    # BEFORE the max, pool over positions, add per-filter bias, clamp at 0.
    # max_t relu(conv_t + b) == relu(max_t conv_t + b) by monotonicity.
    conv = conv.reshape(B, S, FT) + mask_ref[...]
    pooled = jnp.maximum(jnp.max(conv, axis=1) + bconv_ref[...], 0.0)  # (B, 3*F)

    # dropout: identity in inference mode.
    # TODO(synk): training-mode dropout (stateful PRNG masking) not implemented.
    out_ref[...] = (jnp.dot(pooled.astype(jnp.bfloat16), wfc_ref[...],
                            preferred_element_type=jnp.float32)
                    + bfc_ref[...])                                   # full-lane (B, 128) store


@jax.jit
def textcnn_forward(x, emb_table, conv_ws, conv_bs, wfc, bfc):
    # Mimic the PyTorch forward: x is a tuple, token ids are x[0].
    tokens = x[0].astype(jnp.int32)                                   # (B, S)
    B, S = tokens.shape
    C = wfc.shape[1]
    F = conv_bs[0].shape[-1]
    FT = F * len(conv_ws)

    # Token-level im2col: tok_unf[b,t,dt] = tokens[b,t+dt] (-1 sentinel past the
    # end), replicated across each V_PAD-wide lane block (layout plumbing only).
    shifted = [jnp.concatenate([tokens[:, dt:],
                                jnp.full((B, dt), -1, jnp.int32)], axis=1)
               for dt in range(KMAX)]
    tok_unf = jnp.stack(shifted, axis=-1).reshape(B * S, KMAX)        # (B*S, KMAX)
    tok_rep = jnp.repeat(tok_unf, V_PAD, axis=1)                      # (B*S, KMAX*V_PAD)

    # Block-diagonal bf16 embedding table: rows [dt*V_PAD + v] -> lane group dt.
    tbl_blk = jnp.zeros((KMAX * V_PAD, KMAX * EMBED), jnp.float32)
    for dt in range(KMAX):
        tbl_blk = tbl_blk.at[dt * V_PAD:dt * V_PAD + emb_table.shape[0],
                             dt * EMBED:(dt + 1) * EMBED].set(emb_table)
    tbl_blk = tbl_blk.astype(jnp.bfloat16)

    # All conv branches as one (KMAX*E, 3F) weight, zero-padded past each k.
    wcat = jnp.zeros((KMAX * EMBED, FT), jnp.float32)
    for idx, w in enumerate(conv_ws):
        k = w.shape[0]
        wcat = wcat.at[:k * EMBED, idx * F:(idx + 1) * F].set(w.reshape(k * EMBED, F))
    wcat = wcat.astype(jnp.bfloat16)
    bcat = jnp.concatenate(conv_bs, axis=1)                           # (1, 3F) f32

    # Additive mask: -1e30 for window starts t >= S-k+1 of each branch.
    rows = jnp.arange(S, dtype=jnp.int32)[:, None]                    # (S, 1)
    thr = jnp.repeat(jnp.asarray([S - w.shape[0] + 1 for w in conv_ws], jnp.int32),
                     F)[None, :]                                      # (1, 3F)
    mask = jnp.where(rows < thr, 0.0, -1e30).astype(jnp.float32)      # (S, 3F)

    # FC params padded lane-dense (.., 128) so the final store is unmasked.
    wfc_pad = jnp.zeros((FT, C_PAD), jnp.bfloat16).at[:, :C].set(wfc.astype(jnp.bfloat16))
    bfc_pad = jnp.zeros((1, C_PAD), jnp.float32).at[:, :C].set(bfc)

    ins = [tok_rep, tbl_blk, wcat, bcat, mask, wfc_pad, bfc_pad]

    # Advisory cost estimate so XLA schedules around this tiny custom call.
    flops = (2 * B * S * (KMAX * V_PAD) * (KMAX * EMBED)    # embed+unfold matmul
             + 2 * B * S * (KMAX * EMBED) * FT              # conv matmul
             + 2 * B * FT * C_PAD)                          # fc matmul
    bytes_accessed = sum(int(a.size) * a.dtype.itemsize for a in ins) + B * C_PAD * 4

    vmem = pl.BlockSpec(memory_space=pltpu.MemorySpace.VMEM)
    # NOTE: at realistic batch sizes add a leading batch grid with
    # dimension_semantics=("parallel",) (v7x: two TensorCores split it), give
    # table/weights constant index_maps so they stay VMEM-resident, and size the
    # batch tile for v7x's 64 MiB VMEM (32 MiB default scoped limit).
    out_pad = pl.pallas_call(
        textcnn_kernel,
        out_shape=jax.ShapeDtypeStruct((B, C_PAD), jnp.float32),
        in_specs=[vmem] * len(ins),
        out_specs=vmem,
        cost_estimate=pl.CostEstimate(flops=flops, transcendentals=0,
                                      bytes_accessed=bytes_accessed),
    )(*ins)
    return out_pad[:, :C]                                             # slice fused under jit


if __name__ == "__main__":
    key = jax.random.PRNGKey(0)
    keys = jax.random.split(key, 10)

    emb_table = jax.random.normal(keys[0], (N_VOCAB, EMBED), jnp.float32) * 0.1

    conv_ws, conv_bs = [], []
    for i, k in enumerate(FILTER_SIZES):
        # PyTorch Conv2d weight (F, 1, k, E) is stored here as (k, E, F).
        conv_ws.append(jax.random.normal(keys[1 + i], (k, EMBED, NUM_FILTERS),
                                         jnp.float32) * 0.1)
        conv_bs.append(jax.random.normal(keys[4 + i], (1, NUM_FILTERS),
                                         jnp.float32) * 0.1)

    # PyTorch Linear weight (C, in) is stored transposed as (in, C).
    wfc = jax.random.normal(keys[7], (NUM_FILTERS * len(FILTER_SIZES), NUM_CLASSES),
                            jnp.float32) * 0.1
    bfc = jax.random.normal(keys[8], (1, NUM_CLASSES), jnp.float32) * 0.1

    tokens = jax.random.randint(keys[9], (BATCH, SEQ), 0, N_VOCAB, jnp.int32)
    x = (tokens,)

    out = textcnn_forward(x, emb_table, conv_ws, conv_bs, wfc, bfc)
    out = jax.block_until_ready(out)
    assert out.shape == (BATCH, NUM_CLASSES)

    # Pure-JAX f32 reference (PyTorch op order: relu(conv + b) then max-pool).
    emb = emb_table[tokens]                                           # (B, S, E)
    feats = []
    for w, b in zip(conv_ws, conv_bs):
        k = w.shape[0]
        L = SEQ - k + 1
        conv = sum(jnp.einsum('ble,ef->blf', emb[:, dt:dt + L, :], w[dt])
                   for dt in range(k)) + b                            # (B, L, F)
        feats.append(jnp.max(jax.nn.relu(conv), axis=1))
    ref = jnp.concatenate(feats, axis=1) @ wfc + bfc
    assert jnp.allclose(out, ref, rtol=5e-2, atol=5e-2), "mismatch vs f32 reference"

    print("KERNEL_OK")
</pallas_src>

<mosaic_0001>
module attributes {stable_mosaic.version = 11 : i64} {
  func.func @textcnn_kernel(%arg0: memref<32x256xi32, #tpu.memory_space<vmem>>, %arg1: memref<256x128xbf16, #tpu.memory_space<vmem>>, %arg2: memref<128x24xbf16, #tpu.memory_space<vmem>>, %arg3: memref<1x24xf32, #tpu.memory_space<vmem>>, %arg4: memref<16x24xf32, #tpu.memory_space<vmem>>, %arg5: memref<24x128xbf16, #tpu.memory_space<vmem>>, %arg6: memref<1x128xf32, #tpu.memory_space<vmem>>, %arg7: memref<2x128xf32, #tpu.memory_space<vmem>>) attributes {dimension_semantics = [], scalar_prefetch = 0 : i64, scratch_operands = 0 : i64, tpu.core_type = #tpu.core_type<tc>} {
    %0 = tpu.iota {dimensions = array<i32: 1>} : vector<32x256xi32>
    %c63_i32 = arith.constant 63 : i32
    %1 = vector.broadcast %c63_i32 : i32 to vector<32x256xi32>
    %2 = arith.andi %0, %1 : vector<32x256xi32>
    %c0 = arith.constant 0 : index
    %c0_0 = arith.constant 0 : index
    %3 = vector.load %arg0[%c0, %c0_0] : memref<32x256xi32, #tpu.memory_space<vmem>>, vector<32x256xi32>
    %4 = arith.cmpi eq, %2, %3 : vector<32x256xi32>
    %5 = arith.extui %4 : vector<32x256xi1> to vector<32x256xi32>
    %6 = arith.sitofp %5 : vector<32x256xi32> to vector<32x256xf32>
    %7 = arith.truncf %6 : vector<32x256xf32> to vector<32x256xbf16>
    %c0_1 = arith.constant 0 : index
    %c0_2 = arith.constant 0 : index
    %8 = vector.load %arg1[%c0_1, %c0_2] : memref<256x128xbf16, #tpu.memory_space<vmem>>, vector<256x128xbf16>
    %cst = arith.constant dense<0.000000e+00> : vector<32x128xf32>
    %9 = tpu.matmul %7, %8, %cst {dimension_numbers = #tpu.dot_dimension_numbers<[1], [0], [0], [1], [0, 0, 1, 1], [], []>} : vector<32x256xbf16>, vector<256x128xbf16>, vector<32x128xf32> -> vector<32x128xf32>
    %10 = arith.truncf %9 : vector<32x128xf32> to vector<32x128xbf16>
    %c0_3 = arith.constant 0 : index
    %c0_4 = arith.constant 0 : index
    %11 = vector.load %arg2[%c0_3, %c0_4] : memref<128x24xbf16, #tpu.memory_space<vmem>>, vector<128x24xbf16>
    %cst_5 = arith.constant dense<0.000000e+00> : vector<32x24xf32>
    %12 = tpu.matmul %10, %11, %cst_5 {dimension_numbers = #tpu.dot_dimension_numbers<[1], [0], [0], [1], [0, 0, 1, 1], [], []>} : vector<32x128xbf16>, vector<128x24xbf16>, vector<32x24xf32> -> vector<32x24xf32>
    %13 = vector.shape_cast %12 : vector<32x24xf32> to vector<2x16x24xf32>
    %c0_6 = arith.constant 0 : index
    %c0_7 = arith.constant 0 : index
    %14 = vector.load %arg4[%c0_6, %c0_7] : memref<16x24xf32, #tpu.memory_space<vmem>>, vector<16x24xf32>
    %15 = vector.shape_cast %14 : vector<16x24xf32> to vector<1x16x24xf32>
    %16 = vector.broadcast %15 : vector<1x16x24xf32> to vector<2x16x24xf32>
    %17 = arith.addf %13, %16 : vector<2x16x24xf32>
    %cst_8 = arith.constant dense<0xFF800000> : vector<2x24xf32>
    %18 = vector.multi_reduction <maximumf>, %17, %cst_8 [1] : vector<2x16x24xf32> to vector<2x24xf32>
    %c0_9 = arith.constant 0 : index
    %c0_10 = arith.constant 0 : index
    %19 = vector.load %arg3[%c0_9, %c0_10] : memref<1x24xf32, #tpu.memory_space<vmem>>, vector<1x24xf32>
    %20 = vector.broadcast %19 : vector<1x24xf32> to vector<2x24xf32>
    %21 = arith.addf %18, %20 : vector<2x24xf32>
    %cst_11 = arith.constant 0.000000e+00 : f32
    %22 = vector.broadcast %cst_11 : f32 to vector<2x24xf32>
    %23 = arith.maximumf %21, %22 : vector<2x24xf32>
    %24 = arith.truncf %23 : vector<2x24xf32> to vector<2x24xbf16>
    %c0_12 = arith.constant 0 : index
    %c0_13 = arith.constant 0 : index
    %25 = vector.load %arg5[%c0_12, %c0_13] : memref<24x128xbf16, #tpu.memory_space<vmem>>, vector<24x128xbf16>
    %cst_14 = arith.constant dense<0.000000e+00> : vector<2x128xf32>
    %26 = tpu.matmul %24, %25, %cst_14 {dimension_numbers = #tpu.dot_dimension_numbers<[1], [0], [0], [1], [0, 0, 1, 1], [], []>} : vector<2x24xbf16>, vector<24x128xbf16>, vector<2x128xf32> -> vector<2x128xf32>
    %c0_15 = arith.constant 0 : index
    %c0_16 = arith.constant 0 : index
    %27 = vector.load %arg6[%c0_15, %c0_16] : memref<1x128xf32, #tpu.memory_space<vmem>>, vector<1x128xf32>
    %28 = vector.broadcast %27 : vector<1x128xf32> to vector<2x128xf32>
    %29 = arith.addf %26, %28 : vector<2x128xf32>
    %c0_17 = arith.constant 0 : index
    %c0_18 = arith.constant 0 : index
    %30 = vector.load %arg7[%c0_17, %c0_18] : memref<2x128xf32, #tpu.memory_space<vmem>>, vector<2x128xf32>
    tpu.vector_store %arg7[%c0_17, %c0_18], %29 {strides = array<i32>} : memref<2x128xf32, #tpu.memory_space<vmem>>, vector<2x128xf32>,
    return
  }
}

</mosaic_0001>

<llo_original>
// kernel: lt.11
$region0: #{lt.11}
  %s0 = inlined_call_operand.vmem [shape: s32[3,8], index: 0, kind: input, shape index: {}]
  %s1 = inlined_call_operand.vmem [shape: s32[24], index: 1, kind: output, shape index: {}]
  $region1: #{lt.11} parent=0
    #allocation0 [shape = 'u8[4096]{0}', space=vmem, size = 0x1000, scoped, tag = 'scoped mem for output reshape']
    #allocation1 [shape = 'u8[4096]{0}', space=vmem, size = 0x1000, scoped, tag = 'scoped mem for input reshape']
    %s3 = sshllo.u32 0, 4
    %v4 = vld [vmem:[%s0] sm:%s3]
    %5 = vst [vmem:[#allocation1] sm:%s3] %v4
    %v6 = vld [vmem:[#allocation1] sm:$0x1]
    %vm7 = vcmask 64512
    %8 = vst.msk [vmem:[#allocation0] sm:$0x1] %vm7, %v6
    %s9 = scalar_lea.vmem [#allocation1], 2
    %v10 = vld [vmem:[%s9] sm:$0x1]
    %11 = vrot.lane.b32.xlu0 %v10, 16
    %v12 = vpop.permute.xlu0 %11
    %vm13 = vcmask 195712
    %14 = vst.msk [vmem:[#allocation0] sm:$0x1] %vm13, %v12
    %s15 = scalar_lea.vmem [#allocation1], 1
    %v16 = vld [vmem:[%s15] sm:$0x1]
    %17 = vrot.lane.b32.xlu0 %v16, 8
    %v18 = vpop.permute.xlu0 %17
    %vm19 = vcmask 130112
    %20 = vst.msk [vmem:[#allocation0] sm:$0x1] %vm19, %v18
    %s22 = sshllo.u32 0, 1
    %v24 = vld [vmem:[#allocation0] sm:%s22]
    %s25 = sshllo.u32 0, 1
    %26 = vst [vmem:[%s1] sm:%s25] %v24

// kernel: textcnn_forward.1
$region0: #{textcnn_forward.1}
  #allocation0 [shape = 'u32[]', space=smem, size = 0x4, offset = 0x4, fixed_abs, tag = 'smem constant byte address 0x4 - core index']
  #allocation1 [shape = 'u32[144,128]{1,0:T(1,128)}', space=vmem, size = 0x12000, scoped, tag = 'internal scratch']
  %s0 = inlined_call_operand.vmem [shape: s32[32,256], index: 0, kind: input, shape index: {}]
  %s1 = inlined_call_operand.vmem [shape: bf16[256,128], index: 1, kind: input, shape index: {}]
  %s2 = inlined_call_operand.vmem [shape: bf16[128,24], index: 2, kind: input, shape index: {}]
  %s3 = inlined_call_operand.vmem [shape: f32[1,24], index: 3, kind: input, shape index: {}]
  %s4 = inlined_call_operand.vmem [shape: f32[16,24], index: 4, kind: input, shape index: {}]
  %s5 = inlined_call_operand.vmem [shape: bf16[24,128], index: 5, kind: input, shape index: {}]
  %s6 = inlined_call_operand.vmem [shape: f32[1,128], index: 6, kind: input, shape index: {}]
  %s7 = inlined_call_operand.hbm [shape: f32[2,128], index: 7, kind: output, shape index: {}]
  %s8 = sld [smem:[#allocation0]]
  $region38: #{textcnn_forward.1} parent=0
    _
  %s10 = ssub.s32 1, %s8
  %s11 = scalar_select 0, %s10, %s8
  $region1: #{textcnn_forward.1} parent=0
    #allocation2 [shape = 'u8[1024]{0}', space=vmem, size = 0x400, scoped, tag = 'output window, operand 0, single buffered']
    #allocation3 [shape = 's32[1]{0}', space=sflag, size = 0x4, scoped, tag = 'scoped memory for textcnn_forward.1']
    %12 = vsyncpa [#allocation3], 0
    // Predicated region
    $region2: #{textcnn_forward.1} parent=1 // pred_check
      _
    $region3: #{textcnn_forward.1} parent=1 // pred_check_branch
      %14 = sbr.rel (0) target = $region5
    $region4: #{textcnn_forward.1} parent=1 // pred_region
      _
    $region5: #{textcnn_forward.1} parent=1 // pred_fallthru
      _
    // Predicated region
    $region6: #{textcnn_forward.1} parent=1 // pred_check
      _
    $region7: #{textcnn_forward.1} parent=1 // pred_check_branch
      %16 = sbr.rel (0) target = $region9
    $region8: #{textcnn_forward.1} parent=1 // pred_region
      _
    $region9: #{textcnn_forward.1} parent=1 // pred_fallthru
      _
    // Predicated region
    $region10: #{textcnn_forward.1} parent=1 // pred_check
      _
    $region11: #{textcnn_forward.1} parent=1 // pred_check_branch
      %18 = sbr.rel (0) target = $region13
    $region12: #{textcnn_forward.1} parent=1 // pred_region
      _
    $region13: #{textcnn_forward.1} parent=1 // pred_fallthru
      _
    // Predicated region
    $region14: #{textcnn_forward.1} parent=1 // pred_check
      _
    $region15: #{textcnn_forward.1} parent=1 // pred_check_branch
      %20 = sbr.rel (0) target = $region17
    $region16: #{textcnn_forward.1} parent=1 // pred_region
      _
    $region17: #{textcnn_forward.1} parent=1 // pred_fallthru
      _
    // Predicated region
    $region18: #{textcnn_forward.1} parent=1 // pred_check
      _
    $region19: #{textcnn_forward.1} parent=1 // pred_check_branch
      %22 = sbr.rel (0) target = $region21
    $region20: #{textcnn_forward.1} parent=1 // pred_region
      _
    $region21: #{textcnn_forward.1} parent=1 // pred_fallthru
      _
    // Predicated region
    $region22: #{textcnn_forward.1} parent=1 // pred_check
      _
    $region23: #{textcnn_forward.1} parent=1 // pred_check_branch
      %24 = sbr.rel (0) target = $region25
    $region24: #{textcnn_forward.1} parent=1 // pred_region
      _
    $region25: #{textcnn_forward.1} parent=1 // pred_fallthru
      _
    // Predicated region
    $region26: #{textcnn_forward.1} parent=1 // pred_check
      _
    $region27: #{textcnn_forward.1} parent=1 // pred_check_branch
      %26 = sbr.rel (0) target = $region29
    $region28: #{textcnn_forward.1} parent=1 // pred_region
      _
    $region29: #{textcnn_forward.1} parent=1 // pred_fallthru
      _
    %v28 = vlaneseq
    %v29 = vand.u32 %v28, 127
    %v30 = vadd.s32 %v29, 128
    %v31 = vand.u32 %v29, 63
    %v32 = vand.u32 %v30, 63
    %v33 = vld [vmem:[%s0] sm:$0xff]
    %v34 = vld [vmem:[%s0 + $0x8] sm:$0xff]
    %v35 = vld [vmem:[%s0 + $0x10] sm:$0xff]
    %v36 = vld [vmem:[%s0 + $0x18] sm:$0xff]
    %v37 = vld [vmem:[%s0 + $0x20] sm:$0xff]
    %v38 = vld [vmem:[%s0 + $0x28] sm:$0xff]
    %v39 = vld [vmem:[%s0 + $0x30] sm:$0xff]
    %v40 = vld [vmem:[%s0 + $0x38] sm:$0xff]
    %vm41 = vcmp.eq.s32.totalorder %v31, %v33
    %vm42 = vcmp.eq.s32.totalorder %v32, %v34
    %vm43 = vcmp.eq.s32.totalorder %v31, %v35
    %vm44 = vcmp.eq.s32.totalorder %v32, %v36
    %vm45 = vcmp.eq.s32.totalorder %v31, %v37
    %vm46 = vcmp.eq.s32.totalorder %v32, %v38
    %vm47 = vcmp.eq.s32.totalorder %v31, %v39
    %vm48 = vcmp.eq.s32.totalorder %v32, %v40
    %v49 = vsel %vm41, 1, 0
    %v50 = vsel %vm42, 1, 0
    %v51 = vsel %vm43, 1, 0
    %v52 = vsel %vm44, 1, 0
    %v53 = vsel %vm45, 1, 0
    %v54 = vsel %vm46, 1, 0
    %v55 = vsel %vm47, 1, 0
    %v56 = vsel %vm48, 1, 0
    %v57 = vcvt.s32.f32 %v49
    %v58 = vcvt.s32.f32 %v50
    %v59 = vcvt.s32.f32 %v51
    %v60 = vcvt.s32.f32 %v52
    %v61 = vcvt.s32.f32 %v53
    %v62 = vcvt.s32.f32 %v54
    %v63 = vcvt.s32.f32 %v55
    %v64 = vcvt.s32.f32 %v56
    %v65 = vpack.c.bf16 %v59, %v57
    %v66 = vpack.c.bf16 %v60, %v58
    %v67 = vpack.c.bf16 %v63, %v61
    %v68 = vpack.c.bf16 %v64, %v62
    %v69 = vld [vmem:[%s1] sm:$0xf]
    %v70 = vld [vmem:[%s1 + $0x4] sm:$0xf]
    %v71 = vld [vmem:[%s1 + $0x8] sm:$0xf]
    %v72 = vld [vmem:[%s1 + $0xc] sm:$0xf]
    %v73 = vld [vmem:[%s1 + $0x10] sm:$0xf]
    %v74 = vld [vmem:[%s1 + $0x14] sm:$0xf]
    %v75 = vld [vmem:[%s1 + $0x18] sm:$0xf]
    %v76 = vld [vmem:[%s1 + $0x1c] sm:$0xf]
    %v77 = vld [vmem:[%s1 + $0x20] sm:$0xf]
    %v78 = vld [vmem:[%s1 + $0x24] sm:$0xf]
    %v79 = vld [vmem:[%s1 + $0x28] sm:$0xf]
    %v80 = vld [vmem:[%s1 + $0x2c] sm:$0xf]
    %v81 = vld [vmem:[%s1 + $0x30] sm:$0xf]
    %v82 = vld [vmem:[%s1 + $0x34] sm:$0xf]
    %v83 = vld [vmem:[%s1 + $0x38] sm:$0xf]
    %v84 = vld [vmem:[%s1 + $0x3c] sm:$0xf]
    %v85 = vld [vmem:[%s1 + $0x40] sm:$0xf]
    %v86 = vld [vmem:[%s1 + $0x44] sm:$0xf]
    %v87 = vld [vmem:[%s1 + $0x48] sm:$0xf]
    %v88 = vld [vmem:[%s1 + $0x4c] sm:$0xf]
    %v89 = vld [vmem:[%s1 + $0x50] sm:$0xf]
    %v90 = vld [vmem:[%s1 + $0x54] sm:$0xf]
    %v91 = vld [vmem:[%s1 + $0x58] sm:$0xf]
    %v92 = vld [vmem:[%s1 + $0x5c] sm:$0xf]
    %v93 = vld [vmem:[%s1 + $0x60] sm:$0xf]
    %v94 = vld [vmem:[%s1 + $0x64] sm:$0xf]
    %v95 = vld [vmem:[%s1 + $0x68] sm:$0xf]
    %v96 = vld [vmem:[%s1 + $0x6c] sm:$0xf]
    %v97 = vld [vmem:[%s1 + $0x70] sm:$0xf]
    %v98 = vld [vmem:[%s1 + $0x74] sm:$0xf]
    %v99 = vld [vmem:[%s1 + $0x78] sm:$0xf]
    %v100 = vld [vmem:[%s1 + $0x7c] sm:$0xf]
    %v133 = vunpack.c.l.b16 %v69
    %v134 = vunpack.c.l.b16 %v70
    %v135 = vunpack.c.l.b16 %v71
    %v136 = vunpack.c.l.b16 %v72
    %v137 = vunpack.c.l.b16 %v73
    %v138 = vunpack.c.l.b16 %v74
    %v139 = vunpack.c.l.b16 %v75
    %v140 = vunpack.c.l.b16 %v76
    %v141 = vunpack.c.l.b16 %v77
    %v142 = vunpack.c.l.b16 %v78
    %v143 = vunpack.c.l.b16 %v79
    %v144 = vunpack.c.l.b16 %v80
    %v145 = vunpack.c.l.b16 %v81
    %v146 = vunpack.c.l.b16 %v82
    %v147 = vunpack.c.l.b16 %v83
    %v148 = vunpack.c.l.b16 %v84
    %v149 = vunpack.c.l.b16 %v85
    %v150 = vunpack.c.l.b16 %v86
    %v151 = vunpack.c.l.b16 %v87
    %v152 = vunpack.c.l.b16 %v88
    %v153 = vunpack.c.l.b16 %v89
    %v154 = vunpack.c.l.b16 %v90
    %v155 = vunpack.c.l.b16 %v91
    %v156 = vunpack.c.l.b16 %v92
    %v157 = vunpack.c.l.b16 %v93
    %v158 = vunpack.c.l.b16 %v94
    %v159 = vunpack.c.l.b16 %v95
    %v160 = vunpack.c.l.b16 %v96
    %v161 = vunpack.c.l.b16 %v97
    %v162 = vunpack.c.l.b16 %v98
    %v163 = vunpack.c.l.b16 %v99
    %v164 = vunpack.c.l.b16 %v100
    %v165 = vpack.c.b16 %v134, %v133
    %v166 = vpack.c.b16 %v136, %v135
    %v167 = vpack.c.b16 %v138, %v137
    %v168 = vpack.c.b16 %v140, %v139
    %v169 = vpack.c.b16 %v142, %v141
    %v170 = vpack.c.b16 %v144, %v143
    %v171 = vpack.c.b16 %v146, %v145
    %v172 = vpack.c.b16 %v148, %v147
    %v173 = vpack.c.b16 %v150, %v149
    %v174 = vpack.c.b16 %v152, %v151
    %v175 = vpack.c.b16 %v154, %v153
    %v176 = vpack.c.b16 %v156, %v155
    %v177 = vpack.c.b16 %v158, %v157
    %v178 = vpack.c.b16 %v160, %v159
    %v179 = vpack.c.b16 %v162, %v161
    %v180 = vpack.c.b16 %v164, %v163
    %197 = vmatprep.subr.bf16.mxu0 0
    %198 = vmatpush1.bf16.msra.mxu0 %v165
    %199 = vmatprep.subr.bf16.mxu0 0
    %200 = vmatpush1.bf16.msra.mxu0 %v166
    %201 = vmatprep.subr.bf16.mxu0 0
    %202 = vmatpush1.bf16.msra.mxu0 %v167
    %203 = vmatprep.subr.bf16.mxu0 0
    %204 = vmatpush1.bf16.msra.mxu0 %v168
    %205 = vmatprep.subr.bf16.mxu0 0
    %206 = vmatpush1.bf16.msra.mxu0 %v169
    %207 = vmatprep.subr.bf16.mxu0 0
    %208 = vmatpush1.bf16.msra.mxu0 %v170
    %209 = vmatprep.subr.bf16.mxu0 0
    %210 = vmatpush1.bf16.msra.mxu0 %v171
    %211 = vmatprep.subr.bf16.mxu0 0
    %212 = vmatpush1.bf16.msra.mxu0 %v172
    %213 = vmatprep.subr.bf16.mxu0 0
    %214 = vmatpush1.bf16.msra.mxu0 %v173
    %215 = vmatprep.subr.bf16.mxu0 0
    %216 = vmatpush1.bf16.msra.mxu0 %v174
    %217 = vmatprep.subr.bf16.mxu0 0
    %218 = vmatpush1.bf16.msra.mxu0 %v175
    %219 = vmatprep.subr.bf16.mxu0 0
    %220 = vmatpush1.bf16.msra.mxu0 %v176
    %221 = vmatprep.subr.bf16.mxu0 0
    %222 = vmatpush1.bf16.msra.mxu0 %v177
    %223 = vmatprep.subr.bf16.mxu0 0
    %224 = vmatpush1.bf16.msra.mxu0 %v178
    %225 = vmatprep.subr.bf16.mxu0 0
    %226 = vmatpush1.bf16.msra.mxu0 %v179
    %227 = vmatprep.subr.bf16.mxu0 0
    %228 = vmatpush1.bf16.msra.mxu0 %v180
    %229 = vmatprep.mubr.bf16.mxu0 %v66
    %230 = vmatmul.mubr.bf16.gmra.mrb[0].mxu0 %v65
    %v231 = vpop.f32.mrb[0].mxu0
    %v232 = vadd.f32 0.0, %v231
    %v233 = vpop.f32.mrb[0].mxu0
    %v234 = vpop.f32.mrb[0].mxu0
    %v235 = vadd.f32 0.0, %v234
    %v236 = vpop.f32.mrb[0].mxu0
    %237 = vmatprep.mubr.bf16.mxu0 %v68
    %238 = vmatmul.mubr.bf16.gmra.mrb[0].mxu0 %v67
    %v239 = vpop.f32.mrb[0].mxu0
    %v240 = vadd.f32 0.0, %v239
    %v241 = vpop.f32.mrb[0].mxu0
    %v242 = vpop.f32.mrb[0].mxu0
    %v243 = vadd.f32 0.0, %v242
    %v244 = vpop.f32.mrb[0].mxu0
    %245 = vdwg.mxu0
    %v246 = vpack.c.bf16 %v235, %v232
    %v247 = vpack.c.bf16 %v243, %v240
    %v248 = vld [vmem:[%s2] sm:$0xf]
    %v249 = vld [vmem:[%s2 + $0x4] sm:$0xf]
    %v250 = vld [vmem:[%s2 + $0x8] sm:$0xf]
    %v251 = vld [vmem:[%s2 + $0xc] sm:$0xf]
    %v252 = vld [vmem:[%s2 + $0x10] sm:$0xf]
    %v253 = vld [vmem:[%s2 + $0x14] sm:$0xf]
    %v254 = vld [vmem:[%s2 + $0x18] sm:$0xf]
    %v255 = vld [vmem:[%s2 + $0x1c] sm:$0xf]
    %v256 = vld [vmem:[%s2 + $0x20] sm:$0xf]
    %v257 = vld [vmem:[%s2 + $0x24] sm:$0xf]
    %v258 = vld [vmem:[%s2 + $0x28] sm:$0xf]
    %v259 = vld [vmem:[%s2 + $0x2c] sm:$0xf]
    %v260 = vld [vmem:[%s2 + $0x30] sm:$0xf]
    %v261 = vld [vmem:[%s2 + $0x34] sm:$0xf]
    %v262 = vld [vmem:[%s2 + $0x38] sm:$0xf]
    %v263 = vld [vmem:[%s2 + $0x3c] sm:$0xf]
    %v280 = vunpack.c.l.b16 %v248
    %v281 = vunpack.c.l.b16 %v249
    %v282 = vunpack.c.l.b16 %v250
    %v283 = vunpack.c.l.b16 %v251
    %v284 = vunpack.c.l.b16 %v252
    %v285 = vunpack.c.l.b16 %v253
    %v286 = vunpack.c.l.b16 %v254
    %v287 = vunpack.c.l.b16 %v255
    %v288 = vunpack.c.l.b16 %v256
    %v289 = vunpack.c.l.b16 %v257
    %v290 = vunpack.c.l.b16 %v258
    %v291 = vunpack.c.l.b16 %v259
    %v292 = vunpack.c.l.b16 %v260
    %v293 = vunpack.c.l.b16 %v261
    %v294 = vunpack.c.l.b16 %v262
    %v295 = vunpack.c.l.b16 %v263
    %v296 = vpack.c.b16 %v281, %v280
    %v297 = vpack.c.b16 %v283, %v282
    %v298 = vpack.c.b16 %v285, %v284
    %v299 = vpack.c.b16 %v287, %v286
    %v300 = vpack.c.b16 %v289, %v288
    %v301 = vpack.c.b16 %v291, %v290
    %v302 = vpack.c.b16 %v293, %v292
    %v303 = vpack.c.b16 %v295, %v294
    %312 = vmatprep.subr.bf16.mxu0 0
    %313 = vmatpush1.bf16.msra.mxu0 %v296
    %314 = vmatprep.subr.bf16.mxu0 0
    %315 = vmatpush1.bf16.msra.mxu0 %v297
    %316 = vmatprep.subr.bf16.mxu0 0
    %317 = vmatpush1.bf16.msra.mxu0 %v298
    %318 = vmatprep.subr.bf16.mxu0 0
    %319 = vmatpush1.bf16.msra.mxu0 %v299
    %320 = vmatprep.subr.bf16.mxu0 0
    %321 = vmatpush1.bf16.msra.mxu0 %v300
    %322 = vmatprep.subr.bf16.mxu0 0
    %323 = vmatpush1.bf16.msra.mxu0 %v301
    %324 = vmatprep.subr.bf16.mxu0 0
    %325 = vmatpush1.bf16.msra.mxu0 %v302
    %326 = vmatprep.subr.bf16.mxu0 0
    %327 = vmatpush1.bf16.msra.mxu0 %v303
    %328 = vmatprep.subr.bf16.mxu0 0
    %329 = vmatpush1.bf16.msra.mxu0 0
    %330 = vmatprep.subr.bf16.mxu0 0
    %331 = vmatpush1.bf16.msra.mxu0 0
    %332 = vmatprep.subr.bf16.mxu0 0
    %333 = vmatpush1.bf16.msra.mxu0 0
    %334 = vmatprep.subr.bf16.mxu0 0
    %335 = vmatpush1.bf16.msra.mxu0 0
    %336 = vmatprep.subr.bf16.mxu0 0
    %337 = vmatpush1.bf16.msra.mxu0 0
    %338 = vmatprep.subr.bf16.mxu0 0
    %339 = vmatpush1.bf16.msra.mxu0 0
    %340 = vmatprep.subr.bf16.mxu0 0
    %341 = vmatpush1.bf16.msra.mxu0 0
    %342 = vmatprep.subr.bf16.mxu0 0
    %343 = vmatpush1.bf16.msra.mxu0 0
    %344 = vmatprep.mubr.bf16.mxu0 0
    %345 = vmatmul.mubr.bf16.gmra.mrb[0].mxu0 %v246
    %v346 = vpop.f32.mrb[0].mxu0
    %v347 = vadd.f32 0.0, %v346
    %v348 = vpop.f32.mrb[0].mxu0
    %v349 = vpop.f32.mrb[0].mxu0
    %v350 = vadd.f32 0.0, %v349
    %v351 = vpop.f32.mrb[0].mxu0
    %352 = vmatprep.mubr.bf16.mxu0 0
    %353 = vmatmul.mubr.bf16.gmra.mrb[0].mxu0 %v247
    %v354 = vpop.f32.mrb[0].mxu0
    %v355 = vadd.f32 0.0, %v354
    %v356 = vpop.f32.mrb[0].mxu0
    %v357 = vpop.f32.mrb[0].mxu0
    %v358 = vadd.f32 0.0, %v357
    %v359 = vpop.f32.mrb[0].mxu0
    %360 = vdwg.mxu0
    %v361 = vld [vmem:[%s4] sm:$0xff]
    %v362 = vld [vmem:[%s4 + $0x8] sm:$0xff]
    %v363 = vadd.f32 %v347, %v361
    %v364 = vadd.f32 %v350, %v362
    %v365 = vadd.f32 %v355, %v361
    %v366 = vadd.f32 %v358, %v362
    %vm367 = vcmask 195584
    %v368 = vsel %vm367, %v363, -inf
    %v369 = vsel %vm367, %v364, -inf
    %v370 = vmax.f32 %v368, %v369
    %v371 = vrot.slane %v370, 4
    %v372 = vmax.f32 %v370, %v371
    %v373 = vrot.slane %v372, 2
    %v374 = vmax.f32 %v372, %v373
    %v375 = vrot.slane %v374, 1
    %v376 = vmax.f32 %v374, %v375
    %v377 = vsel %vm367, %v365, -inf
    %v378 = vsel %vm367, %v366, -inf
    %v379 = vmax.f32 %v377, %v378
    %v380 = vrot.slane %v379, 4
    %v381 = vmax.f32 %v379, %v380
    %v382 = vrot.slane %v381, 2
    %v383 = vmax.f32 %v381, %v382
    %v384 = vrot.slane %v383, 1
    %v385 = vmax.f32 %v383, %v384
    %v386 = vld [vmem:[%s3] sm:$0x1]
    %v388 = vlaneseq
    %v389 = vshrl.u32 %v388, 7
    %v390 = vsub.s32 0, %v389
    %v391 = vrot.slane %v386, %v390
    %v393 = vadd.f32 %v376, %v391
    %v394 = vadd.f32 %v385, %v391
    %v395 = vmax.f32 %v393, 0.0
    %v396 = vmax.f32 %v394, 0.0
    %v397 = vpack.c.bf16 %v395, %v395
    %v398 = vpack.c.bf16 %v396, %v396
    %v399 = vld [vmem:[%s5] sm:$0xf]
    %v400 = vld [vmem:[%s5 + $0x4] sm:$0xf]
    %v401 = vld [vmem:[%s5 + $0x8] sm:$0xf]
    %v402 = vld [vmem:[%s6] sm:$0x1]
    %v404 = vlaneseq
    %v405 = vshrl.u32 %v404, 7
    %v406 = vsub.s32 0, %v405
    %v407 = vrot.slane %v402, %v406
    %v411 = vunpack.c.l.b16 %v397
    %v412 = vunpack.c.l.b16 %v398
    %v413 = vrot.slane %v412, 7
    %vm414 = vcmask 1041409
    %v415 = vsel %vm414, %v413, %v411
    %v416 = vpack.c.b16 %v415, %v415
    %v420 = vunpack.c.l.b16 %v399
    %v421 = vunpack.c.l.b16 %v400
    %v422 = vunpack.c.l.b16 %v401
    %v423 = vpack.c.b16 %v421, %v420
    %v424 = vpack.c.b16 %v422, %v422
    %v427 = vsel %vm367, %v416, 0
    %vm429 = vcmask 1043456
    %v431 = vsel %vm429, %v424, 0
    %433 = vmatprep.subr.bf16.mxu0 0
    %434 = vmatpush1.bf16.msra.mxu0 %v423
    %435 = vmatprep.subr.bf16.mxu0 0
    %436 = vmatpush1.bf16.msra.mxu0 %v431
    %437 = vmatprep.subr.bf16.mxu0 0
    %438 = vmatpush1.bf16.msra.mxu0 0
    %439 = vmatprep.subr.bf16.mxu0 0
    %440 = vmatpush1.bf16.msra.mxu0 0
    %441 = vmatprep.subr.bf16.mxu0 0
    %442 = vmatpush1.bf16.msra.mxu0 0
    %443 = vmatprep.subr.bf16.mxu0 0
    %444 = vmatpush1.bf16.msra.mxu0 0
    %445 = vmatprep.subr.bf16.mxu0 0
    %446 = vmatpush1.bf16.msra.mxu0 0
    %447 = vmatprep.subr.bf16.mxu0 0
    %448 = vmatpush1.bf16.msra.mxu0 0
    %449 = vmatprep.subr.bf16.mxu0 0
    %450 = vmatpush1.bf16.msra.mxu0 0
    %451 = vmatprep.subr.bf16.mxu0 0
    %452 = vmatpush1.bf16.msra.mxu0 0
    %453 = vmatprep.subr.bf16.mxu0 0
    %454 = vmatpush1.bf16.msra.mxu0 0
    %455 = vmatprep.subr.bf16.mxu0 0
    %456 = vmatpush1.bf16.msra.mxu0 0
    %457 = vmatprep.subr.bf16.mxu0 0
    %458 = vmatpush1.bf16.msra.mxu0 0
    %459 = vmatprep.subr.bf16.mxu0 0
    %460 = vmatpush1.bf16.msra.mxu0 0
    %461 = vmatprep.subr.bf16.mxu0 0
    %462 = vmatpush1.bf16.msra.mxu0 0
    %463 = vmatprep.subr.bf16.mxu0 0
    %464 = vmatpush1.bf16.msra.mxu0 0
    %465 = vmatprep.mubr.bf16.mxu0 0
    %466 = vmatmul.mubr.bf16.gmra.mrb[0].mxu0 %v427
    %v467 = vpop.f32.mrb[0].mxu0
    %v468 = vadd.f32 %v407, %v467
    %v469 = vpop.f32.mrb[0].mxu0
    %v470 = vpop.f32.mrb[0].mxu0
    %v471 = vpop.f32.mrb[0].mxu0
    %472 = vdwg.mxu0
    %473 = vst [vmem:[#allocation2] sm:$0x3] %v468
    // Predicated region
    $region30: #{textcnn_forward.1} parent=1 // pred_check
      _
    $region31: #{textcnn_forward.1} parent=1 // pred_check_branch
      %475 = sbr.rel (0) target = $region33
    $region32: #{textcnn_forward.1} parent=1 // pred_region
      %s477 = ssub.s32 32, 32
      %478 = vsyncadd [#allocation3], %s477
      %s480 = sshll.u32 [#allocation2], 4
      %s481 = int_to_ptr.vmem [resolvable:$true] %s480
      %483 = dma.vmem_to_hbm [thread:$0]  %s481, 32, %s7, [#allocation3]
    $region33: #{textcnn_forward.1} parent=1 // pred_fallthru
      _
    // Predicated region
    $region34: #{textcnn_forward.1} parent=1 // pred_check
      _
    $region35: #{textcnn_forward.1} parent=1 // pred_check_branch
      %485 = sbr.rel (0) target = $region37
    $region36: #{textcnn_forward.1} parent=1 // pred_region
      %486 = dma.done [#allocation3], 32
    $region37: #{textcnn_forward.1} parent=1 // pred_fallthru
      _
    %487 = vsyncpa [#allocation3], 1

</llo_original>
